<compile_context>
chip_gen: v6e
topology: v6e:2x2x1
jax: 0.10.0
libtpu: 0.0.40
codegen_flags: <defaults>
</compile_context>

<pallas_src>
import jax
import jax.numpy as jnp
from jax import lax
from jax.experimental import pallas as pl
from jax.experimental.pallas import tpu as pltpu

TN_MAX = 32768                       # upper cap on points per grid step
VMEM_WORKSET_BUDGET = 16 * 1024 * 1024   # bytes of live temporaries we target
VMEM_LIMIT_BYTES = 32 * 1024 * 1024      # explicit scoped-VMEM limit (portable)


def _point2plane_kernel(n_ref, pts_ref, pc_ref, psum_ref):
    """One grid step: partial sum of min-plane distance over a tile of points.

    n_ref   : (1,)            int32  SMEM  -- true (unpadded) point count
    pts_ref : (3, TN)         f32    VMEM  -- points, coordinate-major
    pc_ref  : (3*p_pad, 8)    f32    VMEM  -- packed per-plane constants:
                rows [0:p)   = [x basis(3), x.c, 0.5*w, 0.5*h, 0, 0]
                rows [p:2p)  = [y basis(3), y.c, 0, 0, 0, 0]
                rows [2p:3p) = [z basis(3), z.c (sentinel -1e9 on pad), 0...]
    psum_ref: (1, 1, 1)       f32    VMEM  -- this block's partial sum
    """
    i = pl.program_id(0)
    tn = pts_ref.shape[1]
    p_pad = pc_ref.shape[0] // 3
    use_mxu = p_pad >= 16            # static (trace-time) decision

    pts = pts_ref[...]               # (3, TN)
    pc = pc_ref[...]                 # (3*p_pad, 8)

    if use_mxu:
        # One MXU matmul projects onto all three bases of all planes at once.
        basis = pc[:, 0:3]           # (3*p_pad, 3)
        offs = pc[:, 3:4]            # (3*p_pad, 1)
        proj = jnp.dot(basis, pts,
                       preferred_element_type=jnp.float32,
                       precision=lax.Precision.HIGHEST) - offs
        dist_x = proj[0:p_pad, :]
        dist_y = proj[p_pad:2 * p_pad, :]
        dist_z = proj[2 * p_pad:3 * p_pad, :]
    else:
        px = pts[0:1, :]             # (1, TN)
        py = pts[1:2, :]
        pz = pts[2:3, :]

        def proj(lo):
            v = pc[lo:lo + p_pad, 0:3]        # (p_pad, 3)
            off = pc[lo:lo + p_pad, 3:4]      # (p_pad, 1)
            # v . p - (v . c), with v.c precomputed  -> (p_pad, TN)
            return v[:, 0:1] * px + v[:, 1:2] * py + v[:, 2:3] * pz - off

        dist_x = proj(0)
        dist_y = proj(p_pad)
        dist_z = proj(2 * p_pad)

    hw = pc[0:p_pad, 4:5]            # 0.5 * w
    hh = pc[0:p_pad, 5:6]            # 0.5 * h

    dx = jnp.maximum(jnp.abs(dist_x) - hw, 0.0)
    dy = jnp.maximum(jnp.abs(dist_y) - hh, 0.0)
    distance = dx * dx + dy * dy + dist_z * dist_z        # (p_pad, TN)

    min_dist = jnp.min(distance, axis=0, keepdims=True)   # (1, TN)

    n_points = n_ref[0]
    last = pl.num_programs(0) - 1

    # All tiles except the last are fully valid: plain unmasked lane reduce.
    @pl.when(i != last)
    def _():
        psum_ref[...] = jnp.sum(min_dist, keepdims=True)[None]

    # Only the last tile pays for the padded-column mask.
    @pl.when(i == last)
    def _():
        col = i * tn + lax.broadcasted_iota(jnp.int32, (1, tn), 1)
        md = jnp.where(col < n_points, min_dist, 0.0)
        psum_ref[...] = jnp.sum(md, keepdims=True)[None]


def _orthonormal_basis_from_xy(xy):
    # xy: (P, 3, 2) -> x, y, z column vectors, each (P, 3)
    x = xy[:, :, 0]
    y = xy[:, :, 1]
    z = jnp.cross(x, y)
    y = jnp.cross(z, x)

    def normalize(v):
        n = jnp.linalg.norm(v, axis=-1, keepdims=True)
        return v / jnp.clip(n, 1e-12)

    return normalize(x), normalize(y), normalize(z)


def plane_geometry_forward(points, center, xy, wh):
    """points: (N, 3); center: (P, 3); xy: (P, 3, 2); wh: (P, 2)."""
    points = points.astype(jnp.float32)
    center = center.astype(jnp.float32)
    wh = wh.astype(jnp.float32)
    x, y, z = _orthonormal_basis_from_xy(xy.astype(jnp.float32))

    n_points = points.shape[0]
    n_plane = center.shape[0]

    # ---- per-plane constants hoisted out of the grid loop ----
    vcx = jnp.sum(x * center, axis=1)
    vcy = jnp.sum(y * center, axis=1)
    vcz = jnp.sum(z * center, axis=1)
    hwh = 0.5 * wh                                            # (P, 2)

    # Pad the plane axis to a sublane multiple of 8; sentinel planes get a
    # huge z-offset so they can never win the min over planes.
    p_pad = ((n_plane + 7) // 8) * 8
    pad_p = p_pad - n_plane
    if pad_p:
        padv = lambda a: jnp.pad(a, ((0, pad_p), (0, 0)))
        pad1 = lambda a: jnp.pad(a, ((0, pad_p),))
        x, y, z, hwh = padv(x), padv(y), padv(z), padv(hwh)
        vcx, vcy = pad1(vcx), pad1(vcy)
        vcz = jnp.pad(vcz, ((0, pad_p),), constant_values=-1e9)

    # Pack all plane constants into one resident VMEM block (3*p_pad, 8).
    zeros2 = jnp.zeros((p_pad, 2), jnp.float32)
    row_x = jnp.concatenate([x, vcx[:, None], hwh, zeros2], axis=1)
    row_y = jnp.concatenate([y, vcy[:, None], zeros2, zeros2], axis=1)
    row_z = jnp.concatenate([z, vcz[:, None], zeros2, zeros2], axis=1)
    plane_const = jnp.concatenate([row_x, row_y, row_z], axis=0)  # (3*p_pad, 8)

    # ---- point tiling: big lane tiles, VMEM-budget aware ----
    # ~6 live (p_pad, TN) f32 temporaries + double-buffered (3, TN) points.
    bytes_per_col = 4 * (6 * p_pad + 6)
    tn_cap = max(128, (VMEM_WORKSET_BUDGET // bytes_per_col) // 128 * 128)
    tn_cap = min(TN_MAX, tn_cap)

    tn = min(tn_cap, pl.cdiv(n_points, 128) * 128)
    # v7x megacore: keep >= 2 blocks on the parallel axis whenever possible.
    if n_points > 128 and pl.cdiv(n_points, tn) < 2:
        tn = pl.cdiv(pl.cdiv(n_points, 2), 128) * 128
    n_pad = pl.cdiv(n_points, tn) * tn
    num_blocks = n_pad // tn

    pts_t = jnp.pad(points, ((0, n_pad - n_points), (0, 0))).T   # (3, n_pad)
    n_arr = jnp.asarray([n_points], dtype=jnp.int32)             # scalar prefetch

    psums = pl.pallas_call(
        _point2plane_kernel,
        out_shape=jax.ShapeDtypeStruct((num_blocks, 1, 1), jnp.float32),
        grid_spec=pltpu.PrefetchScalarGridSpec(
            num_scalar_prefetch=1,
            grid=(num_blocks,),
            in_specs=[
                pl.BlockSpec((3, tn), lambda i, n: (0, i)),          # points
                pl.BlockSpec((3 * p_pad, 8), lambda i, n: (0, 0)),   # constants
            ],
            out_specs=pl.BlockSpec((1, 1, 1), lambda i, n: (i, 0, 0)),
        ),
        compiler_params=pltpu.CompilerParams(
            dimension_semantics=("parallel",),
            vmem_limit_bytes=VMEM_LIMIT_BYTES),
    )(n_arr, pts_t, plane_const)

    loss_p2p = jnp.sum(psums) / jnp.float32(n_points)
    # loss_area = mean(|w*h|)   (init_with_box == False path)
    loss_area = jnp.mean(jnp.abs(wh[:, 0] * wh[:, 1]))
    return {"loss_point2plane": loss_p2p, "loss_area": loss_area}


def _reference_forward(points, center, xy, wh):
    x, y, z = _orthonormal_basis_from_xy(xy)
    diff = points[None, :, :] - center[:, None, :]              # (P, N, 3)
    dist_x = jnp.einsum("pnd,pd->pn", diff, x)
    dist_y = jnp.einsum("pnd,pd->pn", diff, y)
    dist_z = jnp.einsum("pnd,pd->pn", diff, z)
    dist_x = jnp.maximum(jnp.abs(dist_x) - wh[:, 0:1] / 2, 0.0)
    dist_y = jnp.maximum(jnp.abs(dist_y) - wh[:, 1:2] / 2, 0.0)
    distance = dist_x ** 2 + dist_y ** 2 + dist_z ** 2
    return {
        "loss_point2plane": jnp.mean(jnp.min(distance, axis=0)),
        "loss_area": jnp.mean(jnp.abs(wh[:, 0] * wh[:, 1])),
    }


if __name__ == "__main__":
    key = jax.random.PRNGKey(0)
    k_center, k_points, k_xy, k_wh, k_c2, k_p2 = jax.random.split(key, 6)

    # ---- case 1: small plane count (VPU path), mirrors PlaneGeometry.__init__
    n_plane = 8
    n_points = 200   # not a multiple of 128 -> exercises the padding mask
    center = jax.random.uniform(k_center, (n_plane, 3), dtype=jnp.float32)
    xy = jnp.tile(jnp.eye(3, dtype=jnp.float32)[None, :, :2], (n_plane, 1, 1))
    wh = jnp.ones((n_plane, 2), dtype=jnp.float32)
    points = jax.random.normal(k_points, (n_points, 3), dtype=jnp.float32)

    out = jax.block_until_ready(plane_geometry_forward(points, center, xy, wh))
    ref = _reference_forward(points, center, xy, wh)
    assert jnp.allclose(out["loss_point2plane"], ref["loss_point2plane"],
                        rtol=1e-5, atol=1e-5), (out, ref)
    assert jnp.allclose(out["loss_area"], ref["loss_area"],
                        rtol=1e-5, atol=1e-5), (out, ref)

    # ---- case 2: larger plane count (p_pad >= 16 -> MXU projection path)
    n_plane2 = 20
    n_points2 = 300
    center2 = jax.random.uniform(k_c2, (n_plane2, 3), dtype=jnp.float32)
    xy2 = jax.random.normal(k_xy, (n_plane2, 3, 2), dtype=jnp.float32)
    wh2 = jax.random.uniform(k_wh, (n_plane2, 2), dtype=jnp.float32) + 0.5
    points2 = jax.random.normal(k_p2, (n_points2, 3), dtype=jnp.float32)

    out2 = jax.block_until_ready(
        plane_geometry_forward(points2, center2, xy2, wh2))
    ref2 = _reference_forward(points2, center2, xy2, wh2)
    assert jnp.allclose(out2["loss_point2plane"], ref2["loss_point2plane"],
                        rtol=1e-4, atol=1e-5), (out2, ref2)
    assert jnp.allclose(out2["loss_area"], ref2["loss_area"],
                        rtol=1e-5, atol=1e-5), (out2, ref2)

    print("KERNEL_OK")
</pallas_src>

<mosaic_0001>
module attributes {stable_mosaic.version = 11 : i64} {
  func.func @_point2plane_kernel(%arg0: i32, %arg1: memref<1xi32, #tpu.memory_space<smem>>, %arg2: memref<3x128xf32, #tpu.memory_space<vmem>>, %arg3: memref<24x8xf32, #tpu.memory_space<vmem>>, %arg4: memref<1x1x1xf32, #tpu.memory_space<vmem>>) attributes {dimension_semantics = [#tpu.dimension_semantics<parallel>], iteration_bounds = array<i64: 2>, scalar_prefetch = 1 : i64, scratch_operands = 0 : i64, tpu.core_type = #tpu.core_type<tc>, window_params = [{transform_indices = @transform_0, window_bounds = array<i64: 3, 128>}, {pipeline_mode = #tpu.pipeline_mode<synchronous>, transform_indices = @transform_1, window_bounds = array<i64: 24, 8>}, {transform_indices = @transform_2, window_bounds = array<i64: 1, 1, 1>}]} {
    %c0 = arith.constant 0 : index
    %c0_0 = arith.constant 0 : index
    %0 = vector.load %arg2[%c0, %c0_0] : memref<3x128xf32, #tpu.memory_space<vmem>>, vector<3x128xf32>
    %c0_1 = arith.constant 0 : index
    %c0_2 = arith.constant 0 : index
    %1 = vector.load %arg3[%c0_1, %c0_2] : memref<24x8xf32, #tpu.memory_space<vmem>>, vector<24x8xf32>
    %2 = vector.extract_strided_slice %0 {offsets = [0, 0], sizes = [1, 128], strides = [1, 1]} : vector<3x128xf32> to vector<1x128xf32>
    %3 = vector.extract_strided_slice %0 {offsets = [1, 0], sizes = [1, 128], strides = [1, 1]} : vector<3x128xf32> to vector<1x128xf32>
    %4 = vector.extract_strided_slice %0 {offsets = [2, 0], sizes = [1, 128], strides = [1, 1]} : vector<3x128xf32> to vector<1x128xf32>
    %5 = vector.extract_strided_slice %1 {offsets = [0, 0], sizes = [8, 3], strides = [1, 1]} : vector<24x8xf32> to vector<8x3xf32>
    %6 = vector.extract_strided_slice %1 {offsets = [0, 3], sizes = [8, 1], strides = [1, 1]} : vector<24x8xf32> to vector<8x1xf32>
    %7 = vector.extract_strided_slice %5 {offsets = [0, 0], sizes = [8, 1], strides = [1, 1]} : vector<8x3xf32> to vector<8x1xf32>
    %8 = vector.broadcast %7 : vector<8x1xf32> to vector<8x128xf32>
    %9 = vector.broadcast %2 : vector<1x128xf32> to vector<8x128xf32>
    %10 = arith.mulf %8, %9 : vector<8x128xf32>
    %11 = vector.extract_strided_slice %5 {offsets = [0, 1], sizes = [8, 1], strides = [1, 1]} : vector<8x3xf32> to vector<8x1xf32>
    %12 = vector.broadcast %11 : vector<8x1xf32> to vector<8x128xf32>
    %13 = vector.broadcast %3 : vector<1x128xf32> to vector<8x128xf32>
    %14 = arith.mulf %12, %13 : vector<8x128xf32>
    %15 = arith.addf %10, %14 : vector<8x128xf32>
    %16 = vector.extract_strided_slice %5 {offsets = [0, 2], sizes = [8, 1], strides = [1, 1]} : vector<8x3xf32> to vector<8x1xf32>
    %17 = vector.broadcast %16 : vector<8x1xf32> to vector<8x128xf32>
    %18 = vector.broadcast %4 : vector<1x128xf32> to vector<8x128xf32>
    %19 = arith.mulf %17, %18 : vector<8x128xf32>
    %20 = arith.addf %15, %19 : vector<8x128xf32>
    %21 = vector.broadcast %6 : vector<8x1xf32> to vector<8x128xf32>
    %22 = arith.subf %20, %21 : vector<8x128xf32>
    %23 = vector.extract_strided_slice %1 {offsets = [8, 0], sizes = [8, 3], strides = [1, 1]} : vector<24x8xf32> to vector<8x3xf32>
    %24 = vector.extract_strided_slice %1 {offsets = [8, 3], sizes = [8, 1], strides = [1, 1]} : vector<24x8xf32> to vector<8x1xf32>
    %25 = vector.extract_strided_slice %23 {offsets = [0, 0], sizes = [8, 1], strides = [1, 1]} : vector<8x3xf32> to vector<8x1xf32>
    %26 = vector.broadcast %25 : vector<8x1xf32> to vector<8x128xf32>
    %27 = vector.broadcast %2 : vector<1x128xf32> to vector<8x128xf32>
    %28 = arith.mulf %26, %27 : vector<8x128xf32>
    %29 = vector.extract_strided_slice %23 {offsets = [0, 1], sizes = [8, 1], strides = [1, 1]} : vector<8x3xf32> to vector<8x1xf32>
    %30 = vector.broadcast %29 : vector<8x1xf32> to vector<8x128xf32>
    %31 = vector.broadcast %3 : vector<1x128xf32> to vector<8x128xf32>
    %32 = arith.mulf %30, %31 : vector<8x128xf32>
    %33 = arith.addf %28, %32 : vector<8x128xf32>
    %34 = vector.extract_strided_slice %23 {offsets = [0, 2], sizes = [8, 1], strides = [1, 1]} : vector<8x3xf32> to vector<8x1xf32>
    %35 = vector.broadcast %34 : vector<8x1xf32> to vector<8x128xf32>
    %36 = vector.broadcast %4 : vector<1x128xf32> to vector<8x128xf32>
    %37 = arith.mulf %35, %36 : vector<8x128xf32>
    %38 = arith.addf %33, %37 : vector<8x128xf32>
    %39 = vector.broadcast %24 : vector<8x1xf32> to vector<8x128xf32>
    %40 = arith.subf %38, %39 : vector<8x128xf32>
    %41 = vector.extract_strided_slice %1 {offsets = [16, 0], sizes = [8, 3], strides = [1, 1]} : vector<24x8xf32> to vector<8x3xf32>
    %42 = vector.extract_strided_slice %1 {offsets = [16, 3], sizes = [8, 1], strides = [1, 1]} : vector<24x8xf32> to vector<8x1xf32>
    %43 = vector.extract_strided_slice %41 {offsets = [0, 0], sizes = [8, 1], strides = [1, 1]} : vector<8x3xf32> to vector<8x1xf32>
    %44 = vector.broadcast %43 : vector<8x1xf32> to vector<8x128xf32>
    %45 = vector.broadcast %2 : vector<1x128xf32> to vector<8x128xf32>
    %46 = arith.mulf %44, %45 : vector<8x128xf32>
    %47 = vector.extract_strided_slice %41 {offsets = [0, 1], sizes = [8, 1], strides = [1, 1]} : vector<8x3xf32> to vector<8x1xf32>
    %48 = vector.broadcast %47 : vector<8x1xf32> to vector<8x128xf32>
    %49 = vector.broadcast %3 : vector<1x128xf32> to vector<8x128xf32>
    %50 = arith.mulf %48, %49 : vector<8x128xf32>
    %51 = arith.addf %46, %50 : vector<8x128xf32>
    %52 = vector.extract_strided_slice %41 {offsets = [0, 2], sizes = [8, 1], strides = [1, 1]} : vector<8x3xf32> to vector<8x1xf32>
    %53 = vector.broadcast %52 : vector<8x1xf32> to vector<8x128xf32>
    %54 = vector.broadcast %4 : vector<1x128xf32> to vector<8x128xf32>
    %55 = arith.mulf %53, %54 : vector<8x128xf32>
    %56 = arith.addf %51, %55 : vector<8x128xf32>
    %57 = vector.broadcast %42 : vector<8x1xf32> to vector<8x128xf32>
    %58 = arith.subf %56, %57 : vector<8x128xf32>
    %59 = vector.extract_strided_slice %1 {offsets = [0, 4], sizes = [8, 1], strides = [1, 1]} : vector<24x8xf32> to vector<8x1xf32>
    %60 = vector.extract_strided_slice %1 {offsets = [0, 5], sizes = [8, 1], strides = [1, 1]} : vector<24x8xf32> to vector<8x1xf32>
    %61 = math.absf %22 : vector<8x128xf32>
    %62 = vector.broadcast %59 : vector<8x1xf32> to vector<8x128xf32>
    %63 = arith.subf %61, %62 : vector<8x128xf32>
    %cst = arith.constant 0.000000e+00 : f32
    %64 = vector.broadcast %cst : f32 to vector<8x128xf32>
    %65 = arith.maximumf %63, %64 : vector<8x128xf32>
    %66 = math.absf %40 : vector<8x128xf32>
    %67 = vector.broadcast %60 : vector<8x1xf32> to vector<8x128xf32>
    %68 = arith.subf %66, %67 : vector<8x128xf32>
    %cst_3 = arith.constant 0.000000e+00 : f32
    %69 = vector.broadcast %cst_3 : f32 to vector<8x128xf32>
    %70 = arith.maximumf %68, %69 : vector<8x128xf32>
    %71 = arith.mulf %65, %65 : vector<8x128xf32>
    %72 = arith.mulf %70, %70 : vector<8x128xf32>
    %73 = arith.addf %71, %72 : vector<8x128xf32>
    %74 = arith.mulf %58, %58 : vector<8x128xf32>
    %75 = arith.addf %73, %74 : vector<8x128xf32>
    %cst_4 = arith.constant dense<0x7F800000> : vector<128xf32>
    %76 = vector.multi_reduction <minimumf>, %75, %cst_4 [0] : vector<8x128xf32> to vector<128xf32>
    %77 = vector.shape_cast %76 : vector<128xf32> to vector<1x128xf32>
    %c0_5 = arith.constant 0 : index
    %78 = memref.load %arg1[%c0_5] : memref<1xi32, #tpu.memory_space<smem>>
    %c1_i32 = arith.constant 1 : i32
    %79 = arith.cmpi ne, %arg0, %c1_i32 : i32
    %80 = arith.extui %79 : i1 to i32
    %c0_i32 = arith.constant 0 : i32
    %81 = arith.cmpi ne, %80, %c0_i32 : i32
    scf.if %81 {
      %85 = vector.shape_cast %77 : vector<1x128xf32> to vector<1x1x128xf32>
      %cst_8 = arith.constant dense<0.000000e+00> : vector<1xf32>
      %86 = vector.multi_reduction <add>, %85, %cst_8 [1, 2] : vector<1x1x128xf32> to vector<1xf32>
      %87 = vector.shape_cast %86 : vector<1xf32> to vector<1x1x1xf32>
      %88 = vector.extract %87[0, 0, 0] : f32 from vector<1x1x1xf32>
      %89 = vector.broadcast %88 : f32 to vector<1x1xf32>
      %90 = vector.shape_cast %89 : vector<1x1xf32> to vector<1x1x1xf32>
      %c0_9 = arith.constant 0 : index
      %c0_10 = arith.constant 0 : index
      %c0_11 = arith.constant 0 : index
      %91 = vector.load %arg4[%c0_9, %c0_10, %c0_11] : memref<1x1x1xf32, #tpu.memory_space<vmem>>, vector<1x1x1xf32>
      tpu.vector_store %arg4[%c0_9, %c0_10, %c0_11], %90 {strides = array<i32>} : memref<1x1x1xf32, #tpu.memory_space<vmem>>, vector<1x1x1xf32>,
    } else {
    }
    %c1_i32_6 = arith.constant 1 : i32
    %82 = arith.cmpi eq, %arg0, %c1_i32_6 : i32
    %83 = arith.extui %82 : i1 to i32
    %c0_i32_7 = arith.constant 0 : i32
    %84 = arith.cmpi ne, %83, %c0_i32_7 : i32
    scf.if %84 {
      %c128_i32 = arith.constant 128 : i32
      %85 = arith.muli %arg0, %c128_i32 : i32
      %86 = tpu.iota {dimensions = array<i32: 1>} : vector<1x128xi32>
      %87 = vector.broadcast %85 : i32 to vector<1x128xi32>
      %88 = arith.addi %87, %86 : vector<1x128xi32>
      %89 = vector.broadcast %78 : i32 to vector<1x128xi32>
      %90 = arith.cmpi slt, %88, %89 : vector<1x128xi32>
      %cst_8 = arith.constant 0.000000e+00 : f32
      %91 = vector.broadcast %cst_8 : f32 to vector<1x128xf32>
      %92 = arith.select %90, %77, %91 : vector<1x128xi1>, vector<1x128xf32>
      %93 = vector.shape_cast %92 : vector<1x128xf32> to vector<1x1x128xf32>
      %cst_9 = arith.constant dense<0.000000e+00> : vector<1xf32>
      %94 = vector.multi_reduction <add>, %93, %cst_9 [1, 2] : vector<1x1x128xf32> to vector<1xf32>
      %95 = vector.shape_cast %94 : vector<1xf32> to vector<1x1x1xf32>
      %96 = vector.extract %95[0, 0, 0] : f32 from vector<1x1x1xf32>
      %97 = vector.broadcast %96 : f32 to vector<1x1xf32>
      %98 = vector.shape_cast %97 : vector<1x1xf32> to vector<1x1x1xf32>
      %c0_10 = arith.constant 0 : index
      %c0_11 = arith.constant 0 : index
      %c0_12 = arith.constant 0 : index
      %99 = vector.load %arg4[%c0_10, %c0_11, %c0_12] : memref<1x1x1xf32, #tpu.memory_space<vmem>>, vector<1x1x1xf32>
      tpu.vector_store %arg4[%c0_10, %c0_11, %c0_12], %98 {strides = array<i32>} : memref<1x1x1xf32, #tpu.memory_space<vmem>>, vector<1x1x1xf32>,
    } else {
    }
    return
  }
  func.func @transform_0(%arg0: i32, %arg1: memref<1xi32, #tpu.memory_space<smem>>) -> (i32, i32) {
    %c0_i32 = arith.constant 0 : i32
    %c0_i32_0 = arith.constant 0 : i32
    return %c0_i32, %arg0 : i32, i32
  }
  func.func @transform_1(%arg0: i32, %arg1: memref<1xi32, #tpu.memory_space<smem>>) -> (i32, i32) {
    %c0_i32 = arith.constant 0 : i32
    %c0_i32_0 = arith.constant 0 : i32
    %c0_i32_1 = arith.constant 0 : i32
    return %c0_i32, %c0_i32_0 : i32, i32
  }
  func.func @transform_2(%arg0: i32, %arg1: memref<1xi32, #tpu.memory_space<smem>>) -> (i32, i32, i32) {
    %c0_i32 = arith.constant 0 : i32
    %c0_i32_0 = arith.constant 0 : i32
    %c0_i32_1 = arith.constant 0 : i32
    return %arg0, %c0_i32, %c0_i32_0 : i32, i32, i32
  }
}

</mosaic_0001>

<llo_original>
// kernel: tpu_custom_call.1
$region0: #{tpu_custom_call.1}
  #allocation0 [shape = 'u32[]', space=smem, size = 0x4, offset = 0x4, fixed_abs, tag = 'smem constant byte address 0x4 - core index']
  #allocation1 [shape = 'u32[144,128]{1,0:T(1,128)}', space=vmem, size = 0x12000, scoped, tag = 'internal scratch']
  #allocation2 [shape = 's32[1]{0}', space=sflag, size = 0x4, scoped, tag = 'scoped memory for tpu_custom_call.1']
  #allocation3 [shape = 's32[1]{0:T(128)S(6)}', space=smem, size = 0x200, scoped, tag = 'prefetched SMEM operand 0']
  %s0 = inlined_call_operand.<no memory space> [shape: s32[1], index: 0, kind: input, shape index: {}]
  %s1 = inlined_call_operand.vmem [shape: f32[3,256], index: 1, kind: input, shape index: {}]
  %s2 = inlined_call_operand.vmem [shape: f32[24,8], index: 2, kind: input, shape index: {}]
  %s3 = inlined_call_operand.vmem [shape: f32[2,1,1], index: 3, kind: output, shape index: {}]
  %s4 = sld [smem:[#allocation0]]
  $region49: #{tpu_custom_call.1} parent=0
    _
  %s6 = ssub.s32 1, %s4
  %s7 = scalar_select 0, %s6, %s4
  %8 = sst [smem:[#allocation3]] %s0
  loop: start=0, step=1, limit=4
  $region2: #{tpu_custom_call.1} parent=0 // loop_pre_header
    _
  $region3: #{tpu_custom_call.1} parent=0 // loop_header
    %s10 = sphi 0, %s14
    %p11 = scmp.ge.s32.totalorder %s10, 4
    %s20 = sphi 0, %s22
    %s23 = sphi 0, %s20
    %s24 = sphi 0, %s23
    %s40 = sphi 0, %s24
    %s44 = sphi 0, %s44
    %s46 = sphi 0, %s44
    %s47 = sphi 0, %s46
    %s61 = sphi 0, %s47
    %s67 = sphi 0, %s69
    %s70 = sphi 0, %s67
    %s71 = sphi 0, %s70
    %s87 = sphi 0, %s71
  $region4: #{tpu_custom_call.1} parent=0 // loop_header_branch
    %13 = sbr.rel (%p11) target = $region8
  $region5: #{tpu_custom_call.1} parent=0 // loop_body
    %s15 = ssub.s32 %s10, 1
    %s16 = ssub.s32 %s10, 2
    %s17 = sadd.s32 %s10, 1
    %s18 = ssub.s32 %s10, %s17
    %p19 = scmp.eq.s32.totalorder %s18, 0
    %s21 = sadd.s32 %s20, 1
    %s22 = scalar_select %p19, %s20, %s21
    %p25 = pneg %p19
    %p26 = scmp.eq.s32.totalorder %s10, 1
    %p27 = por %p25, %p26
    %p28 = scmp.ne.s32.totalorder %s20, %s23
    %p29 = scmp.eq.s32.totalorder %s10, 0
    %p30 = por %p28, %p29
    %p31 = scmp.ne.s32.totalorder %s20, %s23
    %p32 = scmp.eq.s32.totalorder %s15, 1
    %p33 = por %p31, %p32
    %p34 = scmp.ne.s32.totalorder %s23, %s24
    %p35 = scmp.eq.s32.totalorder %s15, 0
    %p36 = por %p34, %p35
    %p37 = scmp.ne.s32.totalorder %s23, %s24
    %p38 = scmp.eq.s32.totalorder %s16, 1
    %p39 = por %p37, %p38
    %p41 = scmp.ne.s32.totalorder %s24, %s40
    %p42 = scmp.eq.s32.totalorder %s16, 0
    %p43 = por %p41, %p42
    %s45 = sadd.s32 %s44, 1
    %p48 = scmp.eq.s32.totalorder %s10, 1
    %p49 = scmp.ne.s32.totalorder %s44, %s46
    %p50 = scmp.eq.s32.totalorder %s10, 0
    %p51 = por %p49, %p50
    %p52 = scmp.ne.s32.totalorder %s44, %s46
    %p53 = scmp.eq.s32.totalorder %s15, 1
    %p54 = por %p52, %p53
    %p55 = scmp.ne.s32.totalorder %s46, %s47
    %p56 = scmp.eq.s32.totalorder %s15, 0
    %p57 = por %p55, %p56
    %p58 = scmp.ne.s32.totalorder %s46, %s47
    %p59 = scmp.eq.s32.totalorder %s16, 1
    %p60 = por %p58, %p59
    %p62 = scmp.ne.s32.totalorder %s47, %s61
    %p63 = scmp.eq.s32.totalorder %s16, 0
    %p64 = por %p62, %p63
    %s65 = ssub.s32 %s10, %s17
    %p66 = scmp.eq.s32.totalorder %s65, 0
    %s68 = sadd.s32 %s67, 1
    %s69 = scalar_select %p66, %s67, %s68
    %p72 = pneg %p66
    %p73 = scmp.eq.s32.totalorder %s10, 1
    %p74 = por %p72, %p73
    %p75 = scmp.ne.s32.totalorder %s67, %s70
    %p76 = scmp.eq.s32.totalorder %s10, 0
    %p77 = por %p75, %p76
    %p78 = scmp.ne.s32.totalorder %s67, %s70
    %p79 = scmp.eq.s32.totalorder %s15, 1
    %p80 = por %p78, %p79
    %p81 = scmp.ne.s32.totalorder %s70, %s71
    %p82 = scmp.eq.s32.totalorder %s15, 0
    %p83 = por %p81, %p82
    %p84 = scmp.ne.s32.totalorder %s70, %s71
    %p85 = scmp.eq.s32.totalorder %s16, 1
    %p86 = por %p84, %p85
    %p88 = scmp.ne.s32.totalorder %s71, %s87
    %p89 = scmp.eq.s32.totalorder %s16, 0
    %p90 = por %p88, %p89
    %p91 = scmp.le.s32.totalorder 1, %s10
    %p92 = scmp.lt.s32.totalorder %s10, 3
    %p93 = pnand %p91, %p92
    %p94 = pneg %p93
    // Predicated region
    $region9: #{tpu_custom_call.1} parent=5 // pred_check
      _
    $region10: #{tpu_custom_call.1} parent=5 // pred_check_branch
      %96 = sbr.rel (%p93) target = $region12
    $region11: #{tpu_custom_call.1} parent=5 // pred_region
      %s97 = ssub.s32 %s10, 1
      // Predicated region
      $region13: #{tpu_custom_call.1} parent=11 // pred_check
        %p98 = pneg %p57
      $region14: #{tpu_custom_call.1} parent=11 // pred_check_branch
        %100 = sbr.rel (%p98) target = $region16
      $region15: #{tpu_custom_call.1} parent=11 // pred_region
        _
      $region16: #{tpu_custom_call.1} parent=11 // pred_fallthru
        _
    $region12: #{tpu_custom_call.1} parent=5 // pred_fallthru
      _
    %p101 = scmp.lt.s32.totalorder %s10, 2
    // Predicated region
    $region17: #{tpu_custom_call.1} parent=5 // pred_check
      %p102 = pneg %p101
    $region18: #{tpu_custom_call.1} parent=5 // pred_check_branch
      %104 = sbr.rel (%p102) target = $region20
    $region19: #{tpu_custom_call.1} parent=5 // pred_region
      // Predicated region
      $region21: #{tpu_custom_call.1} parent=19 // pred_check
        %p105 = pneg %p30
      $region22: #{tpu_custom_call.1} parent=19 // pred_check_branch
        %107 = sbr.rel (%p105) target = $region24
      $region23: #{tpu_custom_call.1} parent=19 // pred_region
        %p108 = scmp.lt.s32.totalorder %s10, 1
        %s109 = scalar_select %p108, %s10, 1
        %s110 = smul.addr %s109, 4
        %s111 = scalar_lea.vmem %s1, %s110
      $region24: #{tpu_custom_call.1} parent=19 // pred_fallthru
        _
    $region20: #{tpu_custom_call.1} parent=5 // pred_fallthru
      _
    %p112 = scmp.le.s32.totalorder 1, %s10
    %p113 = scmp.lt.s32.totalorder %s10, 3
    %p114 = pnand %p112, %p113
    %p115 = pneg %p114
    // Predicated region
    $region25: #{tpu_custom_call.1} parent=5 // pred_check
      _
    $region26: #{tpu_custom_call.1} parent=5 // pred_check_branch
      %117 = sbr.rel (%p114) target = $region28
    $region27: #{tpu_custom_call.1} parent=5 // pred_region
      %s118 = ssub.s32 %s10, 1
      %p119 = scmp.lt.s32.totalorder %s15, 1
      %s120 = scalar_select %p119, %s15, 1
      %s121 = smul.addr %s120, 4
      %s122 = scalar_lea.vmem %s1, %s121
      %p123 = pneg %p36
      %p124 = pneg %p33
      %p125 = pneg %p57
      %p126 = pneg %p54
      %p127 = pneg %p83
      %p128 = pneg %p80
      %p129 = scmp.lt.s32.totalorder %s15, 1
      %s130 = scalar_select %p129, %s15, 1
      %s131 = scalar_lea.vmem %s3, %s130
      %p132 = scmp.lt.s32.totalorder %s15, 1
      %s133 = scalar_select %p132, %s15, 1
      %s134 = smul.addr %s133, 4
      %s135 = scalar_lea.vmem %s1, %s134
      %p136 = scmp.lt.s32.totalorder %s15, 1
      %s137 = scalar_select %p136, %s15, 1
      %s138 = scalar_lea.vmem %s3, %s137
      %v139 = vld [vmem:[%s135] sm:$0x7]
      %v140 = vld [vmem:[%s2] sm:$0xff]
      %v141 = vld [vmem:[%s2 + $0x8] sm:$0xff]
      %v142 = vld [vmem:[%s2 + $0x10] sm:$0xff]
      %144 = vset.pattern.permute.xlu0 0
      %145 = vperm.xlu0 %144, %v140
      %v146 = vpop.permute.xlu0 %145
      %v148 = vlaneseq
      %v149 = vshrl.u32 %v148, 7
      %v150 = vsub.s32 0, %v149
      %v151 = vrot.slane %v139, %v150
      %v152 = vmul.f32 %v146, %v151
      %153 = vset.pattern.permute.xlu0 1
      %154 = vperm.xlu0 %153, %v140
      %v155 = vpop.permute.xlu0 %154
      %v157 = vlaneseq
      %v158 = vshrl.u32 %v157, 7
      %v159 = vsub.s32 1, %v158
      %v160 = vrot.slane %v139, %v159
      %v161 = vmul.f32 %v155, %v160
      %v162 = vadd.f32 %v152, %v161
      %163 = vset.pattern.permute.xlu0 2
      %164 = vperm.xlu0 %163, %v140
      %v165 = vpop.permute.xlu0 %164
      %v167 = vlaneseq
      %v168 = vshrl.u32 %v167, 7
      %v169 = vsub.s32 2, %v168
      %v170 = vrot.slane %v139, %v169
      %v171 = vmul.f32 %v165, %v170
      %v172 = vadd.f32 %v162, %v171
      %173 = vset.pattern.permute.xlu0 3
      %174 = vperm.xlu0 %173, %v140
      %v175 = vpop.permute.xlu0 %174
      %v177 = vsub.f32 %v172, %v175
      %179 = vset.pattern.permute.xlu0 0
      %180 = vperm.xlu0 %179, %v141
      %v181 = vpop.permute.xlu0 %180
      %v183 = vmul.f32 %v181, %v151
      %184 = vset.pattern.permute.xlu0 1
      %185 = vperm.xlu0 %184, %v141
      %v186 = vpop.permute.xlu0 %185
      %v188 = vmul.f32 %v186, %v160
      %v189 = vadd.f32 %v183, %v188
      %190 = vset.pattern.permute.xlu0 2
      %191 = vperm.xlu0 %190, %v141
      %v192 = vpop.permute.xlu0 %191
      %v194 = vmul.f32 %v192, %v170
      %v195 = vadd.f32 %v189, %v194
      %196 = vset.pattern.permute.xlu0 3
      %197 = vperm.xlu0 %196, %v141
      %v198 = vpop.permute.xlu0 %197
      %v200 = vsub.f32 %v195, %v198
      %202 = vset.pattern.permute.xlu0 0
      %203 = vperm.xlu0 %202, %v142
      %v204 = vpop.permute.xlu0 %203
      %v206 = vmul.f32 %v204, %v151
      %207 = vset.pattern.permute.xlu0 1
      %208 = vperm.xlu0 %207, %v142
      %v209 = vpop.permute.xlu0 %208
      %v211 = vmul.f32 %v209, %v160
      %v212 = vadd.f32 %v206, %v211
      %213 = vset.pattern.permute.xlu0 2
      %214 = vperm.xlu0 %213, %v142
      %v215 = vpop.permute.xlu0 %214
      %v217 = vmul.f32 %v215, %v170
      %v218 = vadd.f32 %v212, %v217
      %219 = vset.pattern.permute.xlu0 3
      %220 = vperm.xlu0 %219, %v142
      %v221 = vpop.permute.xlu0 %220
      %v223 = vsub.f32 %v218, %v221
      %v224 = vand.u32 2147483647, %v177
      %225 = vset.pattern.permute.xlu0 4
      %226 = vperm.xlu0 %225, %v140
      %v227 = vpop.permute.xlu0 %226
      %v229 = vsub.f32 %v224, %v227
      %v230 = vmax.f32 %v229, 0.0
      %v231 = vand.u32 2147483647, %v200
      %232 = vset.pattern.permute.xlu0 5
      %233 = vperm.xlu0 %232, %v140
      %v234 = vpop.permute.xlu0 %233
      %v236 = vsub.f32 %v231, %v234
      %v237 = vmax.f32 %v236, 0.0
      %v238 = vmul.f32 %v230, %v230
      %v239 = vmul.f32 %v237, %v237
      %v240 = vadd.f32 %v238, %v239
      %v241 = vmul.f32 %v223, %v223
      %v242 = vadd.f32 %v240, %v241
      %v243 = vrot.slane %v242, 4
      %v244 = vmin.f32 %v242, %v243
      %v245 = vrot.slane %v244, 2
      %v246 = vmin.f32 %v244, %v245
      %v247 = vrot.slane %v246, 1
      %v248 = vmin.f32 %v246, %v247
      %s249 = sld [smem:[#allocation3]]
      %p250 = scmp.ne.s32.totalorder %s15, 1
      // Predicated region
      $region29: #{tpu_custom_call.1} parent=27 // pred_check
        %p251 = pneg %p250
      $region30: #{tpu_custom_call.1} parent=27 // pred_check_branch
        %253 = sbr.rel (%p251) target = $region32
      $region31: #{tpu_custom_call.1} parent=27 // pred_region
        %vm254 = vcmask 1040384
        %v255 = vsel %vm254, %v248, 0.0
        %256 = vadd.xlane.f32.xlu0 %v255
        %v257 = vpop.xlane.xlu0 %256
        %v258 = vrot.slane %v257, 4
        %v259 = vadd.f32 %v257, %v258
        %v260 = vrot.slane %v259, 2
        %v261 = vadd.f32 %v259, %v260
        %v262 = vrot.slane %v261, 1
        %v263 = vadd.f32 %v261, %v262
        %s264 = vtos %v263
        %v265 = vstv %s264
        %vm266 = vcmask 0
        %267 = vst.msk [vmem:[%s138] sm:$0x1] %vm266, %v265
      $region32: #{tpu_custom_call.1} parent=27 // pred_fallthru
        _
      %p268 = scmp.eq.s32.totalorder %s15, 1
      // Predicated region
      $region33: #{tpu_custom_call.1} parent=27 // pred_check
        %p269 = pneg %p268
      $region34: #{tpu_custom_call.1} parent=27 // pred_check_branch
        %271 = sbr.rel (%p269) target = $region36
      $region35: #{tpu_custom_call.1} parent=27 // pred_region
        %s272 = smul.u32 %s15, 128
        %v273 = vlaneseq
        %v274 = vand.u32 %v273, 127
        %v275 = vstv %s272
        %v276 = vadd.s32 %v275, %v274
        %v277 = vstv %s249
        %vm278 = vcmp.lt.s32.totalorder %v276, %v277
        %v279 = vsel %vm278, %v248, 0.0
        %vm280 = vcmask 1040384
        %v281 = vsel %vm280, %v279, 0.0
        %282 = vadd.xlane.f32.xlu0 %v281
        %v283 = vpop.xlane.xlu0 %282
        %v284 = vrot.slane %v283, 4
        %v285 = vadd.f32 %v283, %v284
        %v286 = vrot.slane %v285, 2
        %v287 = vadd.f32 %v285, %v286
        %v288 = vrot.slane %v287, 1
        %v289 = vadd.f32 %v287, %v288
        %s290 = vtos %v289
        %v291 = vstv %s290
        %vm292 = vcmask 0
        %293 = vst.msk [vmem:[%s138] sm:$0x1] %vm292, %v291
      $region36: #{tpu_custom_call.1} parent=27 // pred_fallthru
        _
      %p294 = scmp.lt.s32.totalorder %s15, 1
      %s295 = scalar_select %p294, %s15, 1
      %s296 = scalar_lea.vmem %s3, %s295
      // Predicated region
      $region37: #{tpu_custom_call.1} parent=27 // pred_check
        %p297 = pneg %p80
      $region38: #{tpu_custom_call.1} parent=27 // pred_check_branch
        %299 = sbr.rel (%p297) target = $region40
      $region39: #{tpu_custom_call.1} parent=27 // pred_region
        _
      $region40: #{tpu_custom_call.1} parent=27 // pred_fallthru
        _
    $region28: #{tpu_custom_call.1} parent=5 // pred_fallthru
      _
    %p300 = scmp.le.s32.totalorder 2, %s10
    // Predicated region
    $region41: #{tpu_custom_call.1} parent=5 // pred_check
      %p301 = pneg %p300
    $region42: #{tpu_custom_call.1} parent=5 // pred_check_branch
      %303 = sbr.rel (%p301) target = $region44
    $region43: #{tpu_custom_call.1} parent=5 // pred_region
      %s304 = ssub.s32 %s10, 2
      // Predicated region
      $region45: #{tpu_custom_call.1} parent=43 // pred_check
        %p305 = pneg %p86
      $region46: #{tpu_custom_call.1} parent=43 // pred_check_branch
        %307 = sbr.rel (%p305) target = $region48
      $region47: #{tpu_custom_call.1} parent=43 // pred_region
        %p308 = scmp.lt.s32.totalorder %s16, 1
        %s309 = scalar_select %p308, %s16, 1
        %s310 = scalar_lea.vmem %s3, %s309
      $region48: #{tpu_custom_call.1} parent=43 // pred_fallthru
        _
    $region44: #{tpu_custom_call.1} parent=5 // pred_fallthru
      _
  $region6: #{tpu_custom_call.1} parent=0 // loop_footer
    %s14 = sadd.s32 1, %s10
  $region7: #{tpu_custom_call.1} parent=0 // loop_footer_branch
    %9 = sbr.rel target = $region3
  $region8: #{tpu_custom_call.1} parent=0 // loop_exit
    _

</llo_original>
